<compile_context>
chip_gen: v7x
topology: tpu7x:2x2x1
jax: 0.10.0
libtpu: 0.0.40
codegen_flags: <defaults>
</compile_context>

<pallas_src>
import jax
import jax.numpy as jnp
from jax import lax
from jax.experimental import pallas as pl
from jax.experimental.pallas import tpu as pltpu

_MIB = 1024 * 1024


def _copy_kernel(x_ref, o_ref):
    # Identity "decode(encode(x))" of a lossless codec: copy the tile.
    o_ref[...] = x_ref[...]


def _pallas_copy_2d(x2d, target_block_bytes):
    """HBM->HBM streaming copy of a 2-D slab, row-tiled with auto pipelining."""
    rows, cols = x2d.shape
    elem_bytes = jnp.dtype(x2d.dtype).itemsize
    row_bytes = cols * elem_bytes

    # Second-minor block granularity: 8 sublanes for 32-bit, 32 for uint8.
    sub = 8 if elem_bytes == 4 else 32

    max_tile_rows = max(1, target_block_bytes // row_bytes)
    if max_tile_rows >= rows:
        tile_rows = rows  # single full-extent block (always a legal block shape)
    else:
        tile_rows = max(sub, (max_tile_rows // sub) * sub)
        tile_rows = min(tile_rows, rows)

    grid = (pl.cdiv(rows, tile_rows),)
    block_bytes = tile_rows * row_bytes
    # in + out, double-buffered -> 4 x block, plus headroom; cap at 48 MiB so
    # we keep >= 16 MiB headroom on v7x's 64 MiB VMEM.
    vmem_limit = int(min(48 * _MIB, max(32 * _MIB, 4 * block_bytes + 8 * _MIB)))

    return pl.pallas_call(
        _copy_kernel,
        out_shape=jax.ShapeDtypeStruct((rows, cols), x2d.dtype),
        grid=grid,
        in_specs=[pl.BlockSpec((tile_rows, cols), lambda i: (i, 0))],
        out_specs=pl.BlockSpec((tile_rows, cols), lambda i: (i, 0)),
        compiler_params=pltpu.CompilerParams(
            dimension_semantics=("parallel",),
            vmem_limit_bytes=vmem_limit),
        cost_estimate=pl.CostEstimate(
            flops=0, transcendentals=0,
            bytes_accessed=2 * rows * cols * elem_bytes),
    )(x2d)


def pil_image_module(pil_img, returns_file_size=False, materialize_copy=False,
                     target_block_bytes=8 * _MIB):
    """JAX/Pallas equivalent of PILImageModule.forward.

    pil_img: uint8 array of shape [H, W, C] (HWC, PIL convention).
    materialize_copy=False (default): the lossless round-trip is an identity,
    so the input is returned directly (no kernel, no HBM traffic).
    materialize_copy=True: a fresh output buffer is produced via a lane-dense
    Pallas copy kernel.
    """
    assert pil_img.dtype == jnp.uint8
    h, w, c = pil_img.shape
    total = h * w * c  # uncompressed buffer size in bytes (trace-time constant)

    if not materialize_copy:
        out = pil_img
    elif total % 512 == 0:
        # Fully lane-dense path: bytes -> int32 words -> (rows, LANES) with
        # LANES a multiple of 128.  All reshapes/bitcasts are over contiguous
        # bytes (metadata-only), so there is no extra HBM copy in the wrapper.
        n_words = total // 4
        m = n_words // 128
        d = next(dd for dd in (8, 4, 2, 1) if m % dd == 0)
        lanes = 128 * d
        rows = n_words // lanes
        words = lax.bitcast_convert_type(
            pil_img.reshape(rows, lanes, 4), jnp.int32)
        out_words = _pallas_copy_2d(words, target_block_bytes)
        out = lax.bitcast_convert_type(out_words, jnp.uint8).reshape(h, w, c)
    else:
        # Fallback: (H, W*C) contiguous view; last block dim equals the full
        # minor extent, avoiding the C=3 masked-lane layout.
        x2d = pil_img.reshape(h, w * c)
        out = _pallas_copy_2d(x2d, target_block_bytes).reshape(h, w, c)

    if returns_file_size:
        return out, total
    return out


if __name__ == "__main__":
    key = jax.random.PRNGKey(0)
    k1, k2, k3 = jax.random.split(key, 3)

    # 1) Fallback (H, W*C) path: 16x16x3 = 768 B (not a multiple of 512).
    x1 = jax.random.randint(k1, (16, 16, 3), 0, 256, dtype=jnp.int32).astype(jnp.uint8)
    y1 = jax.block_until_ready(pil_image_module(x1, materialize_copy=True))
    assert y1.shape == x1.shape and y1.dtype == x1.dtype
    assert bool(jnp.all(y1 == x1))

    # 2) Lane-dense word path, single block: 64x32x3 = 6144 B -> (3, 512) int32.
    x2 = jax.random.randint(k2, (64, 32, 3), 0, 256, dtype=jnp.int32).astype(jnp.uint8)
    y2, fsz2 = pil_image_module(x2, returns_file_size=True, materialize_copy=True)
    y2 = jax.block_until_ready(y2)
    assert bool(jnp.all(y2 == x2))
    assert int(fsz2) == 64 * 32 * 3

    # 3) Lane-dense word path, multi-tile grid: 256x64x4 = 65536 B ->
    #    (16, 1024) int32 view, tile_rows = 8 -> grid = (2,).
    x3 = jax.random.randint(k3, (256, 64, 4), 0, 256, dtype=jnp.int32).astype(jnp.uint8)
    y3, fsz3 = pil_image_module(
        x3, returns_file_size=True, materialize_copy=True,
        target_block_bytes=8 * 1024 * 4)  # 8 rows x 1024 lanes x 4 B
    y3 = jax.block_until_ready(y3)
    assert bool(jnp.all(y3 == x3))
    assert int(fsz3) == 256 * 64 * 4

    # 4) Default identity fast path (no kernel launch).
    y4, fsz4 = pil_image_module(x1, returns_file_size=True)
    y4 = jax.block_until_ready(y4)
    assert bool(jnp.all(y4 == x1))
    assert int(fsz4) == 16 * 16 * 3

    print("KERNEL_OK")
</pallas_src>

<mosaic_0001>
module attributes {stable_mosaic.version = 11 : i64} {
  func.func @_copy_kernel(%arg0: i32, %arg1: memref<16x48xi8, #tpu.memory_space<vmem>>, %arg2: memref<16x48xi8, #tpu.memory_space<vmem>>) attributes {dimension_semantics = [#tpu.dimension_semantics<parallel>], iteration_bounds = array<i64: 1>, scalar_prefetch = 0 : i64, scratch_operands = 0 : i64, tpu.core_type = #tpu.core_type<tc>, window_params = [{transform_indices = @transform_0, window_bounds = array<i64: 16, 48>}, {transform_indices = @transform_1, window_bounds = array<i64: 16, 48>}]} {
    %c0 = arith.constant 0 : index
    %c0_0 = arith.constant 0 : index
    %0 = vector.load %arg1[%c0, %c0_0] : memref<16x48xi8, #tpu.memory_space<vmem>>, vector<16x48xi8>
    %c0_1 = arith.constant 0 : index
    %c0_2 = arith.constant 0 : index
    %1 = vector.load %arg2[%c0_1, %c0_2] : memref<16x48xi8, #tpu.memory_space<vmem>>, vector<16x48xi8>
    tpu.vector_store %arg2[%c0_1, %c0_2], %0 {strides = array<i32>} : memref<16x48xi8, #tpu.memory_space<vmem>>, vector<16x48xi8>,
    return
  }
  func.func @transform_0(%arg0: i32) -> (i32, i32) {
    %c0_i32 = arith.constant 0 : i32
    %c0_i32_0 = arith.constant 0 : i32
    return %arg0, %c0_i32 : i32, i32
  }
  func.func @transform_1(%arg0: i32) -> (i32, i32) {
    %c0_i32 = arith.constant 0 : i32
    %c0_i32_0 = arith.constant 0 : i32
    return %arg0, %c0_i32 : i32, i32
  }
}

</mosaic_0001>

<llo_original>
// kernel: tpu_custom_call.1
$region0: #{tpu_custom_call.1}
  #allocation0 [shape = 'u32[]', space=smem, size = 0x4, offset = 0x4, fixed_abs, tag = 'smem constant byte address 0x4 - core index']
  #allocation1 [shape = 'u32[144,128]{1,0:T(1,128)}', space=vmem, size = 0x12000, scoped, tag = 'internal scratch']
  %s0 = inlined_call_operand.hbm [shape: u8[16,48], index: 0, kind: input, shape index: {}]
  %s1 = inlined_call_operand.hbm [shape: u8[16,48], index: 1, kind: output, shape index: {}]
  %s2 = sld [smem:[#allocation0]]
  $region18: #{tpu_custom_call.1} parent=0
    _
  %s4 = ssub.s32 1, %s2
  %s5 = scalar_select 0, %s4, %s2
  $region1: #{tpu_custom_call.1} parent=0
    #allocation2 [shape = 'u8[2048]{0}', space=vmem, size = 0x800, scoped, tag = 'input window, operand 0, single buffered']
    #allocation3 [shape = 's32[1]{0}', space=sflag, size = 0x4, scoped, tag = 'scoped memory for tpu_custom_call.1']
    #allocation4 [shape = 's32[1]{0}', space=sflag, size = 0x4, scoped, tag = 'scoped memory for tpu_custom_call.1']
    #allocation5 [shape = 'u8[2048]{0}', space=vmem, size = 0x800, scoped, tag = 'output window, operand 0, single buffered']
    %6 = vsyncpa [#allocation3], 0
    %7 = vsyncpa [#allocation4], 0
    // Predicated region
    $region2: #{tpu_custom_call.1} parent=1 // pred_check
      _
    $region3: #{tpu_custom_call.1} parent=1 // pred_check_branch
      %9 = sbr.rel (0) target = $region5
    $region4: #{tpu_custom_call.1} parent=1 // pred_region
      %s11 = ssub.s32 64, 64
      %12 = vsyncadd [#allocation3], %s11
      %s13 = sshll.u32 [#allocation2], 4
      %s14 = int_to_ptr.vmem [resolvable:$true] %s13
      %19 = dma.hbm_to_vmem [thread:$0]  %s0, 64, %s14, [#allocation3], 32, 32, 2
    $region5: #{tpu_custom_call.1} parent=1 // pred_fallthru
      _
    // Predicated region
    $region6: #{tpu_custom_call.1} parent=1 // pred_check
      _
    $region7: #{tpu_custom_call.1} parent=1 // pred_check_branch
      %21 = sbr.rel (0) target = $region9
    $region8: #{tpu_custom_call.1} parent=1 // pred_region
      %22 = dma.done [#allocation3], 64
    $region9: #{tpu_custom_call.1} parent=1 // pred_fallthru
      _
    %v23 = vld [vmem:[#allocation2] sm:$0x3]
    %v24 = vld [vmem:[#allocation2 + $0x2] sm:$0x3]
    %vm25 = vcmask 386048
    %26 = vst.msk [vmem:[#allocation5] sm:$0x3] %vm25, %v23
    %27 = vst.msk [vmem:[#allocation5 + $0x2] sm:$0x3] %vm25, %v24
    // Predicated region
    $region10: #{tpu_custom_call.1} parent=1 // pred_check
      _
    $region11: #{tpu_custom_call.1} parent=1 // pred_check_branch
      %29 = sbr.rel (0) target = $region13
    $region12: #{tpu_custom_call.1} parent=1 // pred_region
      %s31 = ssub.s32 64, 64
      %32 = vsyncadd [#allocation4], %s31
      %s33 = sshll.u32 [#allocation5], 4
      %s34 = int_to_ptr.vmem [resolvable:$true] %s33
      %39 = dma.vmem_to_hbm [thread:$0]  %s34, 64, %s1, [#allocation4], 32, 32, 2
    $region13: #{tpu_custom_call.1} parent=1 // pred_fallthru
      _
    // Predicated region
    $region14: #{tpu_custom_call.1} parent=1 // pred_check
      _
    $region15: #{tpu_custom_call.1} parent=1 // pred_check_branch
      %41 = sbr.rel (0) target = $region17
    $region16: #{tpu_custom_call.1} parent=1 // pred_region
      %42 = dma.done [#allocation4], 64
    $region17: #{tpu_custom_call.1} parent=1 // pred_fallthru
      _
    %43 = vsyncpa [#allocation3], 1
    %44 = vsyncpa [#allocation4], 1

</llo_original>
